<compile_context>
chip_gen: v6e
topology: v6e:2x2x1
jax: 0.10.0
libtpu: 0.0.40
codegen_flags: <defaults>
</compile_context>

<pallas_src>
import functools

import jax
import jax.numpy as jnp
from jax.experimental import pallas as pl
from jax.experimental.pallas import tpu as pltpu


def _uanll_kernel(x_ref, y_ref, o_ref, *, clc, confidence, off_value):
    i = pl.program_id(1)

    @pl.when(i == 0)
    def _init():
        o_ref[...] = jnp.zeros_like(o_ref)

    y = y_ref[...]                                   # (tg, W) int32
    logvar = x_ref[clc].astype(jnp.float32)          # (tg, W)

    # loss0 = sum_c (t_c - p_c)^2 with the smoothed one-hot target built as a
    # single select per class (clc is a small trace-time constant).
    loss0 = jnp.zeros(y.shape, jnp.float32)
    for c in range(clc):
        p_c = x_ref[c].astype(jnp.float32)           # (tg, W)
        t_c = jnp.where(y == c, confidence, off_value)
        d_c = t_c - p_c
        loss0 = loss0 + d_c * d_c

    e = jnp.exp(-logvar)                             # EUP

    # Per-step partial sums -> 3 scalars -> accumulate into lanes 0..2 of the
    # (1, 1, 128) output block that stays resident across the inner grid axis.
    s_e = jnp.sum(e)
    s_l0 = jnp.sum(loss0)
    s_lv = jnp.sum(logvar)
    lane = jax.lax.broadcasted_iota(jnp.int32, o_ref.shape, 2)
    part = jnp.where(lane == 0, s_e,
           jnp.where(lane == 1, s_l0,
           jnp.where(lane == 2, s_lv, 0.0)))
    o_ref[...] += part


def uanll_loss(x, y, *, smoothing=0.1, classes=2,
               lane_width=None, max_block_rows=None):
    n, d = x.shape
    clc = classes
    assert clc >= 2, "smoothing/(classes-1) requires classes >= 2"
    assert d == clc + 1, "expects x = [prob (clc cols) | logvar (1 col)]"
    confidence = 1.0 - smoothing
    off_value = smoothing / (clc - 1)

    # ---- tiling ----------------------------------------------------------
    W = lane_width if lane_width is not None else (512 if n >= (1 << 16) else 128)
    assert W % 128 == 0
    # ~512K elements (~6 MiB f32 of x) per block unless overridden.
    tg_max = max_block_rows if max_block_rows is not None else max(16, (512 * 1024) // W)
    rows = -(-n // W)
    tg = max(16, min(tg_max, -(-rows // 16) * 16))   # mult. of 16 (f32 & bf16 tiling)
    block_elems = tg * W
    blocks = -(-n // block_elems)
    splits = 2 if blocks >= 2 else 1     # leading "parallel" axis (v7x: one per TC)
    grid_n = -(-blocks // splits)
    g_tot = splits * grid_n * tg
    n_pad = g_tot * W
    pad = n_pad - n

    # ---- relayout (one fused transpose+pad+reshape pass over x) ----------
    x_t = jnp.transpose(x)                           # [d, n]
    y_i = y.astype(jnp.int32)
    if pad:
        x_t = jnp.pad(x_t, ((0, 0), (0, pad)))       # pads with exact zeros
        y_i = jnp.pad(y_i, (0, pad))
    x_arr = x_t.reshape(d, g_tot, W)                 # free reshape
    y_arr = y_i.reshape(g_tot, W)

    kernel = functools.partial(_uanll_kernel, clc=clc,
                               confidence=confidence, off_value=off_value)

    x_itemsize = jnp.dtype(x.dtype).itemsize
    x_block_bytes = d * tg * W * x_itemsize
    y_block_bytes = tg * W * 4
    vmem_limit = int(2 * (x_block_bytes + y_block_bytes) + (8 << 20))

    cost = pl.CostEstimate(
        flops=int(n_pad * (5 * clc + 6)),
        transcendentals=int(n_pad),
        bytes_accessed=int(n_pad * (d * x_itemsize + 4) + splits * 512))

    parts = pl.pallas_call(
        kernel,
        out_shape=jax.ShapeDtypeStruct((splits, 1, 128), jnp.float32),
        grid=(splits, grid_n),
        in_specs=[
            pl.BlockSpec((d, tg, W), lambda c, i: (0, c * grid_n + i, 0)),
            pl.BlockSpec((tg, W), lambda c, i: (c * grid_n + i, 0)),
        ],
        out_specs=pl.BlockSpec((1, 1, 128), lambda c, i: (c, 0, 0)),
        compiler_params=pltpu.CompilerParams(
            dimension_semantics=("parallel", "arbitrary"),
            vmem_limit_bytes=vmem_limit,
            allow_input_fusion=[True, True]),
        cost_estimate=cost,
    )(x_arr, y_arr)

    # ---- combine partials & subtract the analytic padding contribution ---
    k_const = confidence * confidence + (clc - 1) * off_value * off_value
    s_exp = parts[:, 0, 0].sum() - pad               # pads add exp(-0)=1 each
    s_l0 = parts[:, 0, 1].sum() - pad * k_const      # pads add K each
    s_lv = parts[:, 0, 2].sum()                      # pads add 0
    inv_n = 1.0 / n
    return (s_exp * inv_n) * (s_l0 * inv_n) + (clc * inv_n) * s_lv


def _ref_uanll_loss(x, y, *, smoothing=0.1, classes=2):
    # Pure-JAX reference mirroring the PyTorch code (incl. broadcasting quirk).
    confidence = 1.0 - smoothing
    prob = x[:, :classes].astype(jnp.float32)
    logvar = x[:, classes:].astype(jnp.float32)
    yoh = jnp.full_like(prob, smoothing / (classes - 1))
    yoh = yoh.at[jnp.arange(x.shape[0]), y].set(confidence)
    loss0 = ((yoh - prob) ** 2).sum(axis=1)              # [N]
    loss = jnp.exp(-logvar) * loss0 + classes * logvar   # [N,1] x [N] -> [N,N]
    return loss.mean()


if __name__ == "__main__":
    key = jax.random.PRNGKey(0)
    k1, k2, k3, k4 = jax.random.split(key, 4)

    # Case 1: tiny shape -> single block, single split, heavy padding.
    n1, clc1, sm1 = 300, 2, 0.1
    x1 = jax.random.normal(k1, (n1, clc1 + 1), dtype=jnp.float32)
    y1 = jax.random.randint(k2, (n1,), 0, clc1, dtype=jnp.int32)
    out1 = jax.block_until_ready(uanll_loss(x1, y1, smoothing=sm1, classes=clc1))
    ref1 = _ref_uanll_loss(x1, y1, smoothing=sm1, classes=clc1)
    assert jnp.allclose(out1, ref1, rtol=1e-4, atol=1e-5), (out1, ref1)

    # Case 2: small tiles forced -> multi-step grid + 2-way parallel split +
    # partial padding, with clc=3.
    n2, clc2, sm2 = 4200, 3, 0.2
    x2 = jax.random.normal(k3, (n2, clc2 + 1), dtype=jnp.float32)
    y2 = jax.random.randint(k4, (n2,), 0, clc2, dtype=jnp.int32)
    out2 = jax.block_until_ready(
        uanll_loss(x2, y2, smoothing=sm2, classes=clc2,
                   lane_width=128, max_block_rows=16))
    ref2 = _ref_uanll_loss(x2, y2, smoothing=sm2, classes=clc2)
    assert jnp.allclose(out2, ref2, rtol=1e-4, atol=1e-5), (out2, ref2)

    print("KERNEL_OK")
</pallas_src>

<mosaic_0001>
module attributes {stable_mosaic.version = 11 : i64} {
  func.func @_uanll_kernel(%arg0: i32, %arg1: i32, %arg2: memref<3x16x128xf32, #tpu.memory_space<vmem>>, %arg3: memref<16x128xi32, #tpu.memory_space<vmem>>, %arg4: memref<1x1x128xf32, #tpu.memory_space<vmem>>) attributes {dimension_semantics = [#tpu.dimension_semantics<parallel>, #tpu.dimension_semantics<arbitrary>], iteration_bounds = array<i64: 1, 1>, scalar_prefetch = 0 : i64, scratch_operands = 0 : i64, tpu.core_type = #tpu.core_type<tc>, window_params = [{transform_indices = @transform_0, window_bounds = array<i64: 3, 16, 128>}, {transform_indices = @transform_1, window_bounds = array<i64: 16, 128>}, {transform_indices = @transform_2, window_bounds = array<i64: 1, 1, 128>}]} {
    %c0_i32 = arith.constant 0 : i32
    %0 = arith.cmpi eq, %arg1, %c0_i32 : i32
    %1 = arith.extui %0 : i1 to i32
    %c0_i32_0 = arith.constant 0 : i32
    %2 = arith.cmpi ne, %1, %c0_i32_0 : i32
    scf.if %2 {
      %cst_27 = arith.constant 0.000000e+00 : f32
      %59 = vector.broadcast %cst_27 : f32 to vector<1x1x128xf32>
      %c0_28 = arith.constant 0 : index
      %c0_29 = arith.constant 0 : index
      %c0_30 = arith.constant 0 : index
      %60 = vector.load %arg4[%c0_28, %c0_29, %c0_30] : memref<1x1x128xf32, #tpu.memory_space<vmem>>, vector<1x1x128xf32>
      tpu.vector_store %arg4[%c0_28, %c0_29, %c0_30], %59 {strides = array<i32>} : memref<1x1x128xf32, #tpu.memory_space<vmem>>, vector<1x1x128xf32>,
    } else {
    }
    %c0 = arith.constant 0 : index
    %c0_1 = arith.constant 0 : index
    %3 = vector.load %arg3[%c0, %c0_1] : memref<16x128xi32, #tpu.memory_space<vmem>>, vector<16x128xi32>
    %c2 = arith.constant 2 : index
    %c0_2 = arith.constant 0 : index
    %c0_3 = arith.constant 0 : index
    %4 = vector.load %arg2[%c2, %c0_2, %c0_3] : memref<3x16x128xf32, #tpu.memory_space<vmem>>, vector<1x16x128xf32>
    %5 = vector.shape_cast %4 : vector<1x16x128xf32> to vector<16x128xf32>
    %cst = arith.constant 0.000000e+00 : f32
    %6 = vector.broadcast %cst : f32 to vector<16x128xf32>
    %c0_4 = arith.constant 0 : index
    %c0_5 = arith.constant 0 : index
    %c0_6 = arith.constant 0 : index
    %7 = vector.load %arg2[%c0_4, %c0_5, %c0_6] : memref<3x16x128xf32, #tpu.memory_space<vmem>>, vector<1x16x128xf32>
    %8 = vector.shape_cast %7 : vector<1x16x128xf32> to vector<16x128xf32>
    %c0_i32_7 = arith.constant 0 : i32
    %9 = vector.broadcast %c0_i32_7 : i32 to vector<16x128xi32>
    %10 = arith.cmpi eq, %3, %9 : vector<16x128xi32>
    %cst_8 = arith.constant 0.899999976 : f32
    %cst_9 = arith.constant 1.000000e-01 : f32
    %11 = vector.broadcast %cst_8 : f32 to vector<16x128xf32>
    %12 = vector.broadcast %cst_9 : f32 to vector<16x128xf32>
    %13 = arith.select %10, %11, %12 : vector<16x128xi1>, vector<16x128xf32>
    %14 = arith.subf %13, %8 : vector<16x128xf32>
    %15 = arith.mulf %14, %14 : vector<16x128xf32>
    %16 = arith.addf %6, %15 : vector<16x128xf32>
    %c1 = arith.constant 1 : index
    %c0_10 = arith.constant 0 : index
    %c0_11 = arith.constant 0 : index
    %17 = vector.load %arg2[%c1, %c0_10, %c0_11] : memref<3x16x128xf32, #tpu.memory_space<vmem>>, vector<1x16x128xf32>
    %18 = vector.shape_cast %17 : vector<1x16x128xf32> to vector<16x128xf32>
    %c1_i32 = arith.constant 1 : i32
    %19 = vector.broadcast %c1_i32 : i32 to vector<16x128xi32>
    %20 = arith.cmpi eq, %3, %19 : vector<16x128xi32>
    %cst_12 = arith.constant 0.899999976 : f32
    %cst_13 = arith.constant 1.000000e-01 : f32
    %21 = vector.broadcast %cst_12 : f32 to vector<16x128xf32>
    %22 = vector.broadcast %cst_13 : f32 to vector<16x128xf32>
    %23 = arith.select %20, %21, %22 : vector<16x128xi1>, vector<16x128xf32>
    %24 = arith.subf %23, %18 : vector<16x128xf32>
    %25 = arith.mulf %24, %24 : vector<16x128xf32>
    %26 = arith.addf %16, %25 : vector<16x128xf32>
    %cst_14 = arith.constant 0.000000e+00 : f32
    %27 = vector.broadcast %cst_14 : f32 to vector<16x128xf32>
    %28 = arith.subf %27, %5 : vector<16x128xf32>
    %29 = math.exp %28 : vector<16x128xf32>
    %30 = vector.shape_cast %29 : vector<16x128xf32> to vector<1x16x128xf32>
    %cst_15 = arith.constant dense<0.000000e+00> : vector<1xf32>
    %31 = vector.multi_reduction <add>, %30, %cst_15 [1, 2] : vector<1x16x128xf32> to vector<1xf32>
    %32 = vector.shape_cast %31 : vector<1xf32> to vector<1x1x1xf32>
    %33 = vector.extract %32[0, 0, 0] : f32 from vector<1x1x1xf32>
    %34 = vector.shape_cast %26 : vector<16x128xf32> to vector<1x16x128xf32>
    %cst_16 = arith.constant dense<0.000000e+00> : vector<1xf32>
    %35 = vector.multi_reduction <add>, %34, %cst_16 [1, 2] : vector<1x16x128xf32> to vector<1xf32>
    %36 = vector.shape_cast %35 : vector<1xf32> to vector<1x1x1xf32>
    %37 = vector.extract %36[0, 0, 0] : f32 from vector<1x1x1xf32>
    %38 = vector.shape_cast %5 : vector<16x128xf32> to vector<1x16x128xf32>
    %cst_17 = arith.constant dense<0.000000e+00> : vector<1xf32>
    %39 = vector.multi_reduction <add>, %38, %cst_17 [1, 2] : vector<1x16x128xf32> to vector<1xf32>
    %40 = vector.shape_cast %39 : vector<1xf32> to vector<1x1x1xf32>
    %41 = vector.extract %40[0, 0, 0] : f32 from vector<1x1x1xf32>
    %42 = tpu.iota {dimensions = array<i32: 2>} : vector<1x1x128xi32>
    %c0_i32_18 = arith.constant 0 : i32
    %43 = vector.broadcast %c0_i32_18 : i32 to vector<1x1x128xi32>
    %44 = arith.cmpi eq, %42, %43 : vector<1x1x128xi32>
    %c1_i32_19 = arith.constant 1 : i32
    %45 = vector.broadcast %c1_i32_19 : i32 to vector<1x1x128xi32>
    %46 = arith.cmpi eq, %42, %45 : vector<1x1x128xi32>
    %c2_i32 = arith.constant 2 : i32
    %47 = vector.broadcast %c2_i32 : i32 to vector<1x1x128xi32>
    %48 = arith.cmpi eq, %42, %47 : vector<1x1x128xi32>
    %cst_20 = arith.constant 0.000000e+00 : f32
    %49 = vector.broadcast %41 : f32 to vector<1x1x128xf32>
    %50 = vector.broadcast %cst_20 : f32 to vector<1x1x128xf32>
    %51 = arith.select %48, %49, %50 : vector<1x1x128xi1>, vector<1x1x128xf32>
    %52 = vector.broadcast %37 : f32 to vector<1x1x128xf32>
    %53 = arith.select %46, %52, %51 : vector<1x1x128xi1>, vector<1x1x128xf32>
    %54 = vector.broadcast %33 : f32 to vector<1x1x128xf32>
    %55 = arith.select %44, %54, %53 : vector<1x1x128xi1>, vector<1x1x128xf32>
    %c0_21 = arith.constant 0 : index
    %c0_22 = arith.constant 0 : index
    %c0_23 = arith.constant 0 : index
    %56 = vector.load %arg4[%c0_21, %c0_22, %c0_23] : memref<1x1x128xf32, #tpu.memory_space<vmem>>, vector<1x1x128xf32>
    %57 = arith.addf %56, %55 : vector<1x1x128xf32>
    %c0_24 = arith.constant 0 : index
    %c0_25 = arith.constant 0 : index
    %c0_26 = arith.constant 0 : index
    %58 = vector.load %arg4[%c0_24, %c0_25, %c0_26] : memref<1x1x128xf32, #tpu.memory_space<vmem>>, vector<1x1x128xf32>
    tpu.vector_store %arg4[%c0_24, %c0_25, %c0_26], %57 {strides = array<i32>} : memref<1x1x128xf32, #tpu.memory_space<vmem>>, vector<1x1x128xf32>,
    return
  }
  func.func @transform_0(%arg0: i32, %arg1: i32) -> (i32, i32, i32) {
    %c1_i32 = arith.constant 1 : i32
    %0 = arith.muli %arg0, %c1_i32 : i32
    %1 = arith.addi %0, %arg1 : i32
    %c0_i32 = arith.constant 0 : i32
    %c0_i32_0 = arith.constant 0 : i32
    %c0_i32_1 = arith.constant 0 : i32
    return %c0_i32, %1, %c0_i32_0 : i32, i32, i32
  }
  func.func @transform_1(%arg0: i32, %arg1: i32) -> (i32, i32) {
    %c1_i32 = arith.constant 1 : i32
    %0 = arith.muli %arg0, %c1_i32 : i32
    %1 = arith.addi %0, %arg1 : i32
    %c0_i32 = arith.constant 0 : i32
    %c0_i32_0 = arith.constant 0 : i32
    return %1, %c0_i32 : i32, i32
  }
  func.func @transform_2(%arg0: i32, %arg1: i32) -> (i32, i32, i32) {
    %c0_i32 = arith.constant 0 : i32
    %c0_i32_0 = arith.constant 0 : i32
    %c0_i32_1 = arith.constant 0 : i32
    return %arg0, %c0_i32, %c0_i32_0 : i32, i32, i32
  }
}

</mosaic_0001>

<llo_original>
// kernel: tpu_custom_call.1
$region0: #{tpu_custom_call.1}
  #allocation0 [shape = 'u32[]', space=smem, size = 0x4, offset = 0x4, fixed_abs, tag = 'smem constant byte address 0x4 - core index']
  #allocation1 [shape = 'u32[144,128]{1,0:T(1,128)}', space=vmem, size = 0x12000, scoped, tag = 'internal scratch']
  %s0 = inlined_call_operand.hbm [shape: f32[3,16,128], index: 0, kind: input, shape index: {}]
  %s1 = inlined_call_operand.hbm [shape: s32[16,128], index: 1, kind: input, shape index: {}]
  %s2 = inlined_call_operand.hbm [shape: f32[1,1,128], index: 2, kind: output, shape index: {}]
  %s3 = sld [smem:[#allocation0]]
  $region30: #{tpu_custom_call.1} parent=0
    _
  %s5 = ssub.s32 1, %s3
  %s6 = scalar_select 0, %s5, %s3
  $region1: #{tpu_custom_call.1} parent=0
    #allocation2 [shape = 'u8[24576]{0}', space=vmem, size = 0x6000, scoped, tag = 'input window, operand 0, single buffered']
    #allocation3 [shape = 's32[1]{0}', space=sflag, size = 0x4, scoped, tag = 'scoped memory for tpu_custom_call.1']
    #allocation4 [shape = 's32[1]{0}', space=sflag, size = 0x4, scoped, tag = 'scoped memory for tpu_custom_call.1']
    #allocation5 [shape = 'u8[8192]{0}', space=vmem, size = 0x2000, scoped, tag = 'input window, operand 1, single buffered']
    #allocation6 [shape = 's32[1]{0}', space=sflag, size = 0x4, scoped, tag = 'scoped memory for tpu_custom_call.1']
    #allocation7 [shape = 'u8[512]{0}', space=vmem, size = 0x400, scoped, tag = 'output window, operand 0, single buffered']
    %7 = vsyncpa [#allocation3], 0
    %8 = vsyncpa [#allocation6], 0
    %9 = vsyncpa [#allocation4], 0
    // Predicated region
    $region2: #{tpu_custom_call.1} parent=1 // pred_check
      _
    $region3: #{tpu_custom_call.1} parent=1 // pred_check_branch
      %11 = sbr.rel (0) target = $region5
    $region4: #{tpu_custom_call.1} parent=1 // pred_region
      %s12 = sadd.s32 0, 0
      %s13 = smul.u32 2, %s12
      %s15 = ssub.s32 768, 768
      %16 = vsyncadd [#allocation3], %s15
      %s17 = smul.addr %s13, 128
      %s18 = scalar_lea.hbm %s0, %s17
      %s19 = sshll.u32 [#allocation2], 4
      %s20 = int_to_ptr.vmem [resolvable:$true] %s19
      %25 = dma.hbm_to_vmem [thread:$0]  %s18, 768, %s20, [#allocation3], 128, 128, 8
    $region5: #{tpu_custom_call.1} parent=1 // pred_fallthru
      _
    // Predicated region
    $region6: #{tpu_custom_call.1} parent=1 // pred_check
      _
    $region7: #{tpu_custom_call.1} parent=1 // pred_check_branch
      %27 = sbr.rel (0) target = $region9
    $region8: #{tpu_custom_call.1} parent=1 // pred_region
      %s28 = sadd.s32 0, 0
      %s29 = smul.u32 2, %s28
      %s31 = ssub.s32 256, 256
      %32 = vsyncadd [#allocation6], %s31
      %s33 = smul.addr %s29, 128
      %s34 = scalar_lea.hbm %s1, %s33
      %s35 = sshll.u32 [#allocation5], 4
      %s36 = int_to_ptr.vmem [resolvable:$true] %s35
      %41 = dma.hbm_to_vmem [thread:$0]  %s34, 256, %s36, [#allocation6], 128, 128, 8
    $region9: #{tpu_custom_call.1} parent=1 // pred_fallthru
      _
    // Predicated region
    $region10: #{tpu_custom_call.1} parent=1 // pred_check
      _
    $region11: #{tpu_custom_call.1} parent=1 // pred_check_branch
      %43 = sbr.rel (0) target = $region13
    $region12: #{tpu_custom_call.1} parent=1 // pred_region
      %44 = dma.done [#allocation3], 768
    $region13: #{tpu_custom_call.1} parent=1 // pred_fallthru
      _
    // Predicated region
    $region14: #{tpu_custom_call.1} parent=1 // pred_check
      _
    $region15: #{tpu_custom_call.1} parent=1 // pred_check_branch
      %46 = sbr.rel (0) target = $region17
    $region16: #{tpu_custom_call.1} parent=1 // pred_region
      %47 = dma.done [#allocation6], 256
    $region17: #{tpu_custom_call.1} parent=1 // pred_fallthru
      _
    %s48 = sadd.s32 0, 0
    %s49 = smul.u32 2, %s48
    %s50 = sadd.s32 0, 0
    %s51 = smul.u32 2, %s50
    %p52 = scmp.eq.s32.totalorder 0, 0
    // Predicated region
    $region18: #{tpu_custom_call.1} parent=1 // pred_check
      %p53 = pneg %p52
    $region19: #{tpu_custom_call.1} parent=1 // pred_check_branch
      %55 = sbr.rel (%p53) target = $region21
    $region20: #{tpu_custom_call.1} parent=1 // pred_region
      %56 = vst [vmem:[#allocation7] sm:$0x1] 0.0
    $region21: #{tpu_custom_call.1} parent=1 // pred_fallthru
      _
    %v57 = vld [vmem:[#allocation5] sm:$0xff]
    %v58 = vld [vmem:[#allocation5 + $0x8] sm:$0xff]
    %s59 = scalar_lea.vmem [#allocation2], 32
    %v60 = vld [vmem:[%s59] sm:$0xff]
    %v61 = vld [vmem:[%s59 + $0x8] sm:$0xff]
    %v62 = vld [vmem:[#allocation2] sm:$0xff]
    %v63 = vld [vmem:[#allocation2 + $0x8] sm:$0xff]
    %vm64 = vcmp.eq.s32.totalorder %v57, 0
    %vm65 = vcmp.eq.s32.totalorder %v58, 0
    %v66 = vsel %vm64, 0.9, 0.1
    %v67 = vsel %vm65, 0.9, 0.1
    %v68 = vsub.f32 %v66, %v62
    %v69 = vsub.f32 %v67, %v63
    %v70 = vmul.f32 %v68, %v68
    %v71 = vmul.f32 %v69, %v69
    %v72 = vadd.f32 %v70, 0.0
    %v73 = vadd.f32 %v71, 0.0
    %s74 = scalar_lea.vmem [#allocation2], 16
    %v75 = vld [vmem:[%s74] sm:$0xff]
    %v76 = vld [vmem:[%s74 + $0x8] sm:$0xff]
    %vm77 = vcmp.eq.s32.totalorder %v57, 1
    %vm78 = vcmp.eq.s32.totalorder %v58, 1
    %v79 = vsel %vm77, 0.9, 0.1
    %v80 = vsel %vm78, 0.9, 0.1
    %v81 = vsub.f32 %v79, %v75
    %v82 = vsub.f32 %v80, %v76
    %v83 = vmul.f32 %v81, %v81
    %v84 = vmul.f32 %v82, %v82
    %v85 = vadd.f32 %v72, %v83
    %v86 = vadd.f32 %v73, %v84
    %v87 = vsub.f32 0.0, %v60
    %v88 = vsub.f32 0.0, %v61
    %v89 = vmul.f32 %v87, 1.442695
    %v90 = vpow.pop %v89
    %v91 = vmul.f32 %v88, 1.442695
    %v92 = vpow.pop %v91
    %v93 = vadd.f32 %v90, %v92
    %94 = vadd.xlane.f32.xlu0 %v93
    %v95 = vpop.xlane.xlu0 %94
    %v96 = vrot.slane %v95, 4
    %v97 = vadd.f32 %v95, %v96
    %v98 = vrot.slane %v97, 2
    %v99 = vadd.f32 %v97, %v98
    %v100 = vrot.slane %v99, 1
    %v101 = vadd.f32 %v99, %v100
    %s102 = vtos %v101
    %v103 = vadd.f32 %v85, %v86
    %104 = vadd.xlane.f32.xlu0 %v103
    %v105 = vpop.xlane.xlu0 %104
    %v106 = vrot.slane %v105, 4
    %v107 = vadd.f32 %v105, %v106
    %v108 = vrot.slane %v107, 2
    %v109 = vadd.f32 %v107, %v108
    %v110 = vrot.slane %v109, 1
    %v111 = vadd.f32 %v109, %v110
    %s112 = vtos %v111
    %v113 = vadd.f32 %v60, %v61
    %114 = vadd.xlane.f32.xlu0 %v113
    %v115 = vpop.xlane.xlu0 %114
    %v116 = vrot.slane %v115, 4
    %v117 = vadd.f32 %v115, %v116
    %v118 = vrot.slane %v117, 2
    %v119 = vadd.f32 %v117, %v118
    %v120 = vrot.slane %v119, 1
    %v121 = vadd.f32 %v119, %v120
    %s122 = vtos %v121
    %v123 = vlaneseq
    %v124 = vand.u32 %v123, 127
    %vm125 = vcmp.eq.s32.totalorder %v124, 0
    %vm126 = vcmp.eq.s32.totalorder %v124, 1
    %vm127 = vcmp.eq.s32.totalorder %v124, 2
    %v128 = vstv %s122
    %v129 = vsel %vm127, %v128, 0.0
    %v130 = vstv %s112
    %v131 = vsel %vm126, %v130, %v129
    %v132 = vstv %s102
    %v133 = vsel %vm125, %v132, %v131
    %v134 = vld [vmem:[#allocation7] sm:$0x1]
    %v135 = vadd.f32 %v134, %v133
    %136 = vst [vmem:[#allocation7] sm:$0x1] %v135
    // Predicated region
    $region22: #{tpu_custom_call.1} parent=1 // pred_check
      _
    $region23: #{tpu_custom_call.1} parent=1 // pred_check_branch
      %138 = sbr.rel (0) target = $region25
    $region24: #{tpu_custom_call.1} parent=1 // pred_region
      %s140 = ssub.s32 16, 16
      %141 = vsyncadd [#allocation4], %s140
      %s143 = sshll.u32 [#allocation7], 4
      %s144 = int_to_ptr.vmem [resolvable:$true] %s143
      %146 = dma.vmem_to_hbm [thread:$0]  %s144, 16, %s2, [#allocation4]
    $region25: #{tpu_custom_call.1} parent=1 // pred_fallthru
      _
    // Predicated region
    $region26: #{tpu_custom_call.1} parent=1 // pred_check
      _
    $region27: #{tpu_custom_call.1} parent=1 // pred_check_branch
      %148 = sbr.rel (0) target = $region29
    $region28: #{tpu_custom_call.1} parent=1 // pred_region
      %149 = dma.done [#allocation4], 16
    $region29: #{tpu_custom_call.1} parent=1 // pred_fallthru
      _
    %150 = vsyncpa [#allocation3], 1
    %151 = vsyncpa [#allocation6], 1
    %152 = vsyncpa [#allocation4], 1

</llo_original>
